<compile_context>
chip_gen: v5e
topology: v5e:2x2
jax: 0.10.0
libtpu: 0.0.40
codegen_flags: <defaults>
</compile_context>

<pallas_src>
import functools

import jax
import jax.numpy as jnp
from jax.experimental import pallas as pl
from jax.experimental.pallas import tpu as pltpu


def _round_up(a: int, b: int) -> int:
    return ((a + b - 1) // b) * b


def _one_hot_dict_kernel(x_ref, dict_ref, out_ref):
    # x_ref:    (tile_m, V)  native dtype (upcast per-tile in VMEM)
    # dict_ref: (V, E)       embedding table (same block every grid step)
    # out_ref:  (tile_m, E)  dictionary dtype
    x = x_ref[...].astype(jnp.float32)                                # (tm, V)
    v = x.shape[-1]

    # First-occurrence argmax over the lane axis via iota/where/min.
    row_max = jnp.max(x, axis=-1, keepdims=True)                      # (tm, 1)
    lane_iota = jax.lax.broadcasted_iota(jnp.int32, x.shape, 1)       # (tm, V)
    # If the row contains NaN, row_max is NaN and `x == row_max` is all-false;
    # including isnan(x) makes the first NaN index win, matching argmax.
    hit = (x == row_max) | jnp.isnan(x)
    idx = jnp.min(jnp.where(hit, lane_iota, v), axis=-1, keepdims=True)

    # One-hot of the argmax, then one MXU matmul against the dictionary.
    one_hot = (lane_iota == idx).astype(dict_ref.dtype)               # (tm, V)
    out_ref[...] = jnp.dot(
        one_hot, dict_ref[...], preferred_element_type=jnp.float32
    ).astype(out_ref.dtype)


@functools.partial(jax.jit, static_argnames=("tile_m",))
def one_hot_dictionary(x, dictionary, tile_m=1024):
    """x: (B, N, V) float; dictionary: (V, E) float -> (B, N, E)."""
    B, N, V = x.shape
    V2, E = dictionary.shape
    assert V == V2
    M = B * N

    # Effective row tile: as large as requested but never larger than needed;
    # multiple of 8 for f32 sublane packing.
    tm = min(tile_m, _round_up(M, 8))
    tm = _round_up(tm, 8)
    M_pad = _round_up(M, tm)

    # Prefer >= 2 grid steps so v7x's two TensorCores both get work on the
    # "parallel" axis (only matters when the tile swallowed the whole input).
    if M_pad // tm == 1 and tm > 8:
        tm = _round_up(-(-M // 2), 8)
        M_pad = _round_up(M, tm)

    x_flat = x.reshape(M, V)
    if M_pad != M:
        # Padded rows argmax to index 0 -> harmless embeddings, sliced off below.
        x_flat = jnp.pad(x_flat, ((0, M_pad - M), (0, 0)))

    out_dtype = dictionary.dtype

    out_flat = pl.pallas_call(
        _one_hot_dict_kernel,
        out_shape=jax.ShapeDtypeStruct((M_pad, E), out_dtype),
        grid_spec=pltpu.PrefetchScalarGridSpec(
            num_scalar_prefetch=0,
            grid=(M_pad // tm,),
            in_specs=[
                pl.BlockSpec((tm, V), lambda i: (i, 0)),
                pl.BlockSpec((V, E), lambda i: (0, 0)),
            ],
            out_specs=pl.BlockSpec((tm, E), lambda i: (i, 0)),
        ),
        compiler_params=pltpu.CompilerParams(
            dimension_semantics=("parallel",),
        ),
    )(x_flat, dictionary)

    return out_flat[:M].reshape(B, N, E)


if __name__ == "__main__":
    # Module config (synthetic, deterministic init).
    vocab_size = 64
    emb_size = 32
    B, N = 2, 8

    key = jax.random.PRNGKey(0)
    k_x, k_dict, k_x2 = jax.random.split(key, 3)

    # Inputs: logits/one-hot-ish scores over the vocab.
    x = jax.random.normal(k_x, (B, N, vocab_size), dtype=jnp.float32)
    # nn.Embedding(vocab_size, emb_size).weight equivalent.
    dictionary = jax.random.normal(
        k_dict, (vocab_size, emb_size), dtype=jnp.float32
    )

    out = one_hot_dictionary(x, dictionary)
    out = jax.block_until_ready(out)

    # Pure-JAX reference of the PyTorch forward.
    tokens = jnp.argmax(x, axis=-1)
    ref = jnp.take(dictionary, tokens, axis=0)
    assert out.shape == (B, N, emb_size)
    assert jnp.allclose(out, ref, atol=1e-5, rtol=1e-5)

    # Ragged-shape check: B*N not a multiple of the tile -> padding path.
    B2, N2 = 3, 7
    x2 = jax.random.normal(k_x2, (B2, N2, vocab_size), dtype=jnp.float32)
    out2 = jax.block_until_ready(one_hot_dictionary(x2, dictionary))
    ref2 = jnp.take(dictionary, jnp.argmax(x2, axis=-1), axis=0)
    assert out2.shape == (B2, N2, emb_size)
    assert jnp.allclose(out2, ref2, atol=1e-5, rtol=1e-5)

    print("KERNEL_OK")
</pallas_src>

<mosaic_0001>
module attributes {stable_mosaic.version = 11 : i64} {
  func.func @_one_hot_dict_kernel(%arg0: i32, %arg1: memref<8x64xf32, #tpu.memory_space<vmem>>, %arg2: memref<64x32xf32, #tpu.memory_space<vmem>>, %arg3: memref<8x32xf32, #tpu.memory_space<vmem>>) attributes {dimension_semantics = [#tpu.dimension_semantics<parallel>], iteration_bounds = array<i64: 2>, scalar_prefetch = 0 : i64, scratch_operands = 0 : i64, tpu.core_type = #tpu.core_type<tc>, window_params = [{transform_indices = @transform_0, window_bounds = array<i64: 8, 64>}, {pipeline_mode = #tpu.pipeline_mode<synchronous>, transform_indices = @transform_1, window_bounds = array<i64: 64, 32>}, {transform_indices = @transform_2, window_bounds = array<i64: 8, 32>}]} {
    %c0 = arith.constant 0 : index
    %c0_0 = arith.constant 0 : index
    %0 = vector.load %arg1[%c0, %c0_0] : memref<8x64xf32, #tpu.memory_space<vmem>>, vector<8x64xf32>
    %cst = arith.constant dense<0xFF800000> : vector<8xf32>
    %1 = vector.multi_reduction <maximumf>, %0, %cst [1] : vector<8x64xf32> to vector<8xf32>
    %2 = vector.shape_cast %1 : vector<8xf32> to vector<8x1xf32>
    %3 = tpu.iota {dimensions = array<i32: 1>} : vector<8x64xi32>
    %4 = vector.broadcast %2 : vector<8x1xf32> to vector<8x64xf32>
    %5 = arith.cmpf oeq, %0, %4 : vector<8x64xf32>
    %6 = arith.cmpf one, %0, %0 : vector<8x64xf32>
    %7 = arith.ori %5, %6 : vector<8x64xi1>
    %c64_i32 = arith.constant 64 : i32
    %8 = vector.broadcast %c64_i32 : i32 to vector<8x64xi32>
    %9 = arith.select %7, %3, %8 : vector<8x64xi1>, vector<8x64xi32>
    %cst_1 = arith.constant dense<2147483647> : vector<8xi32>
    %10 = vector.multi_reduction <minsi>, %9, %cst_1 [1] : vector<8x64xi32> to vector<8xi32>
    %11 = vector.shape_cast %10 : vector<8xi32> to vector<8x1xi32>
    %12 = vector.broadcast %11 : vector<8x1xi32> to vector<8x64xi32>
    %13 = arith.cmpi eq, %3, %12 : vector<8x64xi32>
    %14 = arith.extui %13 : vector<8x64xi1> to vector<8x64xi32>
    %15 = arith.sitofp %14 : vector<8x64xi32> to vector<8x64xf32>
    %c0_2 = arith.constant 0 : index
    %c0_3 = arith.constant 0 : index
    %16 = vector.load %arg2[%c0_2, %c0_3] : memref<64x32xf32, #tpu.memory_space<vmem>>, vector<64x32xf32>
    %cst_4 = arith.constant dense<0.000000e+00> : vector<8x32xf32>
    %17 = tpu.matmul %15, %16, %cst_4 {dimension_numbers = #tpu.dot_dimension_numbers<[1], [0], [0], [1], [0, 0, 1, 1], [], []>} : vector<8x64xf32>, vector<64x32xf32>, vector<8x32xf32> -> vector<8x32xf32>
    %c0_5 = arith.constant 0 : index
    %c0_6 = arith.constant 0 : index
    %18 = vector.load %arg3[%c0_5, %c0_6] : memref<8x32xf32, #tpu.memory_space<vmem>>, vector<8x32xf32>
    tpu.vector_store %arg3[%c0_5, %c0_6], %17 {strides = array<i32>} : memref<8x32xf32, #tpu.memory_space<vmem>>, vector<8x32xf32>,
    return
  }
  func.func @transform_0(%arg0: i32) -> (i32, i32) {
    %c0_i32 = arith.constant 0 : i32
    %c0_i32_0 = arith.constant 0 : i32
    return %arg0, %c0_i32 : i32, i32
  }
  func.func @transform_1(%arg0: i32) -> (i32, i32) {
    %c0_i32 = arith.constant 0 : i32
    %c0_i32_0 = arith.constant 0 : i32
    %c0_i32_1 = arith.constant 0 : i32
    return %c0_i32, %c0_i32_0 : i32, i32
  }
  func.func @transform_2(%arg0: i32) -> (i32, i32) {
    %c0_i32 = arith.constant 0 : i32
    %c0_i32_0 = arith.constant 0 : i32
    return %arg0, %c0_i32 : i32, i32
  }
}

</mosaic_0001>

<llo_original>
// kernel: one_hot_dictionary.1
$region0: #{one_hot_dictionary.1}
  #allocation0 [shape = 'u32[]', space=smem, size = 0x4, offset = 0x4, fixed_abs, tag = 'smem constant byte address 0x4 - core index']
  #allocation1 [shape = 'u32[72,128]{1,0:T(1,128)}', space=vmem, size = 0x9000, scoped, tag = 'internal scratch']
  %s0 = inlined_call_operand.vmem [shape: f32[16,64], index: 0, kind: input, shape index: {}]
  %s1 = inlined_call_operand.vmem [shape: f32[64,32], index: 1, kind: input, shape index: {}]
  %s2 = inlined_call_operand.hbm [shape: f32[16,32], index: 2, kind: output, shape index: {}]
  %s3 = sld [smem:[#allocation0]]
  $region41: #{one_hot_dictionary.1} parent=0
    _
  %s5 = ssub.s32 1, %s3
  %s6 = scalar_select 0, %s5, %s3
  $region1: #{one_hot_dictionary.1} parent=0
    #allocation2 [shape = 'u8[8192]{0}', space=vmem, size = 0x2000, scoped, tag = 'output window, operand 0']
    #allocation3 [shape = 's32[2]{0}', space=sflag, size = 0x8, scoped, tag = 'scoped memory for one_hot_dictionary.1']
    %7 = vsyncpa [#allocation3], 0
    %s8 = scalar_lea.sflag [#allocation3], 1
    %9 = vsyncpa %s8, 0
    loop: start=0, step=1, limit=4
    $region2: #{one_hot_dictionary.1} parent=1 // loop_pre_header
      _
    $region3: #{one_hot_dictionary.1} parent=1 // loop_header
      %s11 = sphi 0, %s15
      %p12 = scmp.ge.s32.totalorder %s11, 4
      %s21 = sphi 0, %s23
      %s24 = sphi 0, %s21
      %s25 = sphi 0, %s24
      %s41 = sphi 0, %s25
      %s45 = sphi 0, %s45
      %s47 = sphi 0, %s45
      %s48 = sphi 0, %s47
      %s62 = sphi 0, %s48
      %s68 = sphi 0, %s70
      %s71 = sphi 0, %s68
      %s72 = sphi 0, %s71
      %s88 = sphi 0, %s72
    $region4: #{one_hot_dictionary.1} parent=1 // loop_header_branch
      %14 = sbr.rel (%p12) target = $region8
    $region5: #{one_hot_dictionary.1} parent=1 // loop_body
      %s16 = ssub.s32 %s11, 1
      %s17 = ssub.s32 %s11, 2
      %s18 = sadd.s32 %s11, 1
      %s19 = ssub.s32 %s11, %s18
      %p20 = scmp.eq.s32.totalorder %s19, 0
      %s22 = sadd.s32 %s21, 1
      %s23 = scalar_select %p20, %s21, %s22
      %p26 = pneg %p20
      %p27 = scmp.eq.s32.totalorder %s11, 1
      %p28 = por %p26, %p27
      %p29 = scmp.ne.s32.totalorder %s21, %s24
      %p30 = scmp.eq.s32.totalorder %s11, 0
      %p31 = por %p29, %p30
      %p32 = scmp.ne.s32.totalorder %s21, %s24
      %p33 = scmp.eq.s32.totalorder %s16, 1
      %p34 = por %p32, %p33
      %p35 = scmp.ne.s32.totalorder %s24, %s25
      %p36 = scmp.eq.s32.totalorder %s16, 0
      %p37 = por %p35, %p36
      %p38 = scmp.ne.s32.totalorder %s24, %s25
      %p39 = scmp.eq.s32.totalorder %s17, 1
      %p40 = por %p38, %p39
      %p42 = scmp.ne.s32.totalorder %s25, %s41
      %p43 = scmp.eq.s32.totalorder %s17, 0
      %p44 = por %p42, %p43
      %s46 = sadd.s32 %s45, 1
      %p49 = scmp.eq.s32.totalorder %s11, 1
      %p50 = scmp.ne.s32.totalorder %s45, %s47
      %p51 = scmp.eq.s32.totalorder %s11, 0
      %p52 = por %p50, %p51
      %p53 = scmp.ne.s32.totalorder %s45, %s47
      %p54 = scmp.eq.s32.totalorder %s16, 1
      %p55 = por %p53, %p54
      %p56 = scmp.ne.s32.totalorder %s47, %s48
      %p57 = scmp.eq.s32.totalorder %s16, 0
      %p58 = por %p56, %p57
      %p59 = scmp.ne.s32.totalorder %s47, %s48
      %p60 = scmp.eq.s32.totalorder %s17, 1
      %p61 = por %p59, %p60
      %p63 = scmp.ne.s32.totalorder %s48, %s62
      %p64 = scmp.eq.s32.totalorder %s17, 0
      %p65 = por %p63, %p64
      %s66 = ssub.s32 %s11, %s18
      %p67 = scmp.eq.s32.totalorder %s66, 0
      %s69 = sadd.s32 %s68, 1
      %s70 = scalar_select %p67, %s68, %s69
      %p73 = pneg %p67
      %p74 = scmp.eq.s32.totalorder %s11, 1
      %p75 = por %p73, %p74
      %p76 = scmp.ne.s32.totalorder %s68, %s71
      %p77 = scmp.eq.s32.totalorder %s11, 0
      %p78 = por %p76, %p77
      %p79 = scmp.ne.s32.totalorder %s68, %s71
      %p80 = scmp.eq.s32.totalorder %s16, 1
      %p81 = por %p79, %p80
      %p82 = scmp.ne.s32.totalorder %s71, %s72
      %p83 = scmp.eq.s32.totalorder %s16, 0
      %p84 = por %p82, %p83
      %p85 = scmp.ne.s32.totalorder %s71, %s72
      %p86 = scmp.eq.s32.totalorder %s17, 1
      %p87 = por %p85, %p86
      %p89 = scmp.ne.s32.totalorder %s72, %s88
      %p90 = scmp.eq.s32.totalorder %s17, 0
      %p91 = por %p89, %p90
      %p92 = scmp.le.s32.totalorder 1, %s11
      %p93 = scmp.lt.s32.totalorder %s11, 3
      %p94 = pnand %p92, %p93
      %p95 = pneg %p94
      // Predicated region
      $region9: #{one_hot_dictionary.1} parent=5 // pred_check
        _
      $region10: #{one_hot_dictionary.1} parent=5 // pred_check_branch
        %97 = sbr.rel (%p94) target = $region12
      $region11: #{one_hot_dictionary.1} parent=5 // pred_region
        %s98 = ssub.s32 %s11, 1
        // Predicated region
        $region13: #{one_hot_dictionary.1} parent=11 // pred_check
          %p99 = pneg %p58
        $region14: #{one_hot_dictionary.1} parent=11 // pred_check_branch
          %101 = sbr.rel (%p99) target = $region16
        $region15: #{one_hot_dictionary.1} parent=11 // pred_region
          _
        $region16: #{one_hot_dictionary.1} parent=11 // pred_fallthru
          _
      $region12: #{one_hot_dictionary.1} parent=5 // pred_fallthru
        _
      %p102 = scmp.lt.s32.totalorder %s11, 2
      // Predicated region
      $region17: #{one_hot_dictionary.1} parent=5 // pred_check
        %p103 = pneg %p102
      $region18: #{one_hot_dictionary.1} parent=5 // pred_check_branch
        %105 = sbr.rel (%p103) target = $region20
      $region19: #{one_hot_dictionary.1} parent=5 // pred_region
        // Predicated region
        $region21: #{one_hot_dictionary.1} parent=19 // pred_check
          %p106 = pneg %p31
        $region22: #{one_hot_dictionary.1} parent=19 // pred_check_branch
          %108 = sbr.rel (%p106) target = $region24
        $region23: #{one_hot_dictionary.1} parent=19 // pred_region
          %p109 = scmp.lt.s32.totalorder %s11, 1
          %s110 = scalar_select %p109, %s11, 1
          %s111 = smul.addr %s110, 8
          %s112 = scalar_lea.vmem %s0, %s111
        $region24: #{one_hot_dictionary.1} parent=19 // pred_fallthru
          _
      $region20: #{one_hot_dictionary.1} parent=5 // pred_fallthru
        _
      %p113 = scmp.le.s32.totalorder 1, %s11
      %p114 = scmp.lt.s32.totalorder %s11, 3
      %p115 = pnand %p113, %p114
      %p116 = pneg %p115
      // Predicated region
      $region25: #{one_hot_dictionary.1} parent=5 // pred_check
        _
      $region26: #{one_hot_dictionary.1} parent=5 // pred_check_branch
        %118 = sbr.rel (%p115) target = $region28
      $region27: #{one_hot_dictionary.1} parent=5 // pred_region
        %s119 = ssub.s32 %s11, 1
        %p120 = scmp.lt.s32.totalorder %s16, 1
        %s121 = scalar_select %p120, %s16, 1
        %s122 = smul.addr %s121, 8
        %s123 = scalar_lea.vmem %s0, %s122
        %p124 = pneg %p37
        %p125 = pneg %p34
        %p126 = pneg %p58
        %p127 = pneg %p55
        %p128 = pneg %p84
        %p129 = pneg %p81
        %s130 = sand.u32 %s71, 1
        %s131 = scalar_lea.sflag [#allocation3], %s130
        %s132 = sand.u32 %s71, 1
        %s133 = smul.addr %s132, 8
        %s134 = scalar_lea.vmem [#allocation2], %s133
        %p135 = scmp.lt.s32.totalorder %s16, 1
        %s136 = scalar_select %p135, %s16, 1
        %s137 = smul.addr %s136, 8
        %s138 = scalar_lea.vmem %s0, %s137
        %v139 = vld [vmem:[%s138] sm:$0xff]
        %vm140 = vcmask 523264
        %v141 = vsel %vm140, %v139, -inf
        %142 = vmax.xlane.f32.xlu0 %v141
        %v143 = vpop.xlane.xlu0 %142
        %v144 = vlaneseq
        %v145 = vand.u32 %v144, 127
        %vm146 = vcmp.eq.f32.partialorder %v139, %v143
        %vm147 = vcmp.ne.f32.partialorder %v139, %v139
        %vm148 = vmor %vm146, %vm147
        %v149 = vsel %vm148, %v145, 64
        %v150 = vsel %vm140, %v149, 2147483647
        %v151 = vand.u32 %v150, 65535
        %v152 = vshra.s32 %v150, 16
        %v153 = vcvt.s32.f32 %v151
        %v154 = vcvt.s32.f32 %v152
        %155 = vmin.xlane.f32.xlu0 %v154
        %v156 = vpop.xlane.xlu0 %155
        %vm157 = vcmp.eq.f32.partialorder %v154, %v156
        %v158 = vsel %vm157, %v153, inf
        %159 = vmin.xlane.f32.xlu0 %v158
        %v160 = vpop.xlane.xlu0 %159
        %v161 = vcvt.f32.s32 %v160
        %v162 = vcvt.f32.s32 %v156
        %v163 = vshll.u32 %v162, 16
        %v164 = vadd.s32 %v163, %v161
        %vm165 = vcmp.eq.s32.totalorder %v145, %v164
        %v166 = vsel %vm165, 1, 0
        %v167 = vcvt.s32.f32 %v166
        %v168 = vld [vmem:[%s1] sm:$0xff]
        %v169 = vld [vmem:[%s1 + $0x8] sm:$0xff]
        %v170 = vld [vmem:[%s1 + $0x10] sm:$0xff]
        %v171 = vld [vmem:[%s1 + $0x18] sm:$0xff]
        %v172 = vld [vmem:[%s1 + $0x20] sm:$0xff]
        %v173 = vld [vmem:[%s1 + $0x28] sm:$0xff]
        %v174 = vld [vmem:[%s1 + $0x30] sm:$0xff]
        %v175 = vld [vmem:[%s1 + $0x38] sm:$0xff]
        %v177 = vsel %vm140, %v167, 0
        %179 = vmatpush.msra.mxu0 0.0
        %180 = vmatpush.msra.mxu0 0.0
        %181 = vmatpush.msra.mxu0 0.0
        %182 = vmatpush.msra.mxu0 0.0
        %183 = vmatpush.msra.mxu0 0.0
        %184 = vmatpush.msra.mxu0 0.0
        %185 = vmatpush.msra.mxu0 0.0
        %186 = vmatpush.msra.mxu0 0.0
        %187 = vmatpush.msra.mxu0 %v175
        %188 = vmatpush.msra.mxu0 %v174
        %189 = vmatpush.msra.mxu0 %v173
        %190 = vmatpush.msra.mxu0 %v172
        %191 = vmatpush.msra.mxu0 %v171
        %192 = vmatpush.msra.mxu0 %v170
        %193 = vmatpush.msra.mxu0 %v169
        %194 = vmatpush.msra.mxu0 %v168
        %195 = vmatmul.f32.gmra.mxu0 %v177
        %v196 = vpop.f32.mrf.mxu0
        %v197 = vadd.f32 0.0, %v196
        %198 = vdwg.mxu0
        %vm199 = vcmask 261120
        %200 = vst.msk [vmem:[%s134] sm:$0xff] %vm199, %v197
        %s201 = sand.u32 %s71, 1
        %s202 = scalar_lea.sflag [#allocation3], %s201
        %s203 = sand.u32 %s71, 1
        %s204 = smul.addr %s203, 8
        %s205 = scalar_lea.vmem [#allocation2], %s204
        // Predicated region
        $region29: #{one_hot_dictionary.1} parent=27 // pred_check
          %p206 = pneg %p81
        $region30: #{one_hot_dictionary.1} parent=27 // pred_check_branch
          %208 = sbr.rel (%p206) target = $region32
        $region31: #{one_hot_dictionary.1} parent=27 // pred_region
          %210 = vsyncadd %s202, 0
          %s211 = smul.addr %s16, 8
          %s212 = scalar_lea.hbm %s2, %s211
          %s214 = sshll.u32 %s205, 4
          %s215 = int_to_ptr.vmem [resolvable:$true] %s214
          %s216 = sshll.u32 %s212, 4
          %s217 = int_to_ptr.hbm [resolvable:$true] %s216
          %219 = dma.vmem_to_hbm [thread:$0]  %s215, 128, %s217, %s202
        $region32: #{one_hot_dictionary.1} parent=27 // pred_fallthru
          _
      $region28: #{one_hot_dictionary.1} parent=5 // pred_fallthru
        _
      %p220 = scmp.le.s32.totalorder 2, %s11
      // Predicated region
      $region33: #{one_hot_dictionary.1} parent=5 // pred_check
        %p221 = pneg %p220
      $region34: #{one_hot_dictionary.1} parent=5 // pred_check_branch
        %223 = sbr.rel (%p221) target = $region36
      $region35: #{one_hot_dictionary.1} parent=5 // pred_region
        %s224 = ssub.s32 %s11, 2
        // Predicated region
        $region37: #{one_hot_dictionary.1} parent=35 // pred_check
          %p225 = pneg %p87
        $region38: #{one_hot_dictionary.1} parent=35 // pred_check_branch
          %227 = sbr.rel (%p225) target = $region40
        $region39: #{one_hot_dictionary.1} parent=35 // pred_region
          %s228 = sand.u32 %s72, 1
          %s229 = scalar_lea.sflag [#allocation3], %s228
          %s230 = sand.u32 %s72, 1
          %s231 = smul.addr %s230, 8
          %s232 = scalar_lea.vmem [#allocation2], %s231
          %234 = dma.done %s229, 128
        $region40: #{one_hot_dictionary.1} parent=35 // pred_fallthru
          _
      $region36: #{one_hot_dictionary.1} parent=5 // pred_fallthru
        _
    $region6: #{one_hot_dictionary.1} parent=1 // loop_footer
      %s15 = sadd.s32 1, %s11
    $region7: #{one_hot_dictionary.1} parent=1 // loop_footer_branch
      %10 = sbr.rel target = $region3
    $region8: #{one_hot_dictionary.1} parent=1 // loop_exit
      _
    %235 = vsyncpa [#allocation3], 1
    %s236 = scalar_lea.sflag [#allocation3], 1
    %237 = vsyncpa %s236, 1

</llo_original>
